<compile_context>
chip_gen: v5e
topology: v5e:2x2
jax: 0.10.0
libtpu: 0.0.40
codegen_flags: <defaults>
</compile_context>

<pallas_src>
import functools

import jax
import jax.numpy as jnp
from jax.experimental import pallas as pl
from jax.experimental.pallas import tpu as pltpu

EPS = 1e-5  # nn.BatchNorm1d default eps

# Tile caps for the tiled path (bf16 operands, f32 accumulator).  At the caps
# the double-buffered working set is ~10 MiB, inside every generation's
# scoped-VMEM budget.
TM_CAP, TN_CAP, TK_CAP = 512, 1024, 1024
M_UNIT = 16     # sublane granularity for bf16 activations
LANE = 128      # lane granularity for N / K feature dims
FUSED_WEIGHT_BYTES = 4 * 1024 * 1024   # whole-network fusion threshold
FUSED_MAX_BATCH = 512


def _round_up(x, m):
    return ((x + m - 1) // m) * m


def _tile(dim, unit, cap):
    """Pick (tile, padded_dim): tile % unit == 0, tile <= cap,
    padded_dim % tile == 0, minimal padding (largest tile on ties)."""
    if dim <= cap:
        t = _round_up(dim, unit)
        return t, t
    best = None
    for t in range(cap, unit - 1, -unit):
        pad = _round_up(dim, t)
        if best is None or pad < best[1]:
            best = (t, pad)
    return best


def _largest_div_tile(dim_p, unit, cap):
    """Largest tile (multiple of `unit`, <= cap) dividing padded dim_p."""
    best = unit
    t = unit
    while t <= min(cap, dim_p):
        if dim_p % t == 0:
            best = t
        t += unit
    return best


@functools.lru_cache(maxsize=None)
def _vmem_limit_bytes():
    # v5e/v6e: 128 MiB physical VMEM per TensorCore; v7x: only 64 MiB.
    try:
        phys = int(pltpu.get_tpu_info().vmem_capacity_bytes)
    except Exception:
        phys = 64 * 1024 * 1024
    return int(min(48 * 1024 * 1024, phys * 3 // 4))


# ---------------------------------------------------------------------------
# Tiled kernel: (M,K)@(K,N) matmul with fused affine (+ optional ReLU).
# ---------------------------------------------------------------------------
def _linear_bn_act_kernel(x_ref, w_ref, scale_ref, shift_ref, o_ref, acc_ref,
                          *, apply_act: bool, has_scale: bool):
    k = pl.program_id(2)

    @pl.when(k == 0)
    def _():
        acc_ref[...] = jnp.zeros_like(acc_ref)

    acc_ref[...] += jnp.dot(x_ref[...], w_ref[...],
                            preferred_element_type=jnp.float32)

    @pl.when(k == pl.num_programs(2) - 1)
    def _():
        y = acc_ref[...]
        if has_scale:
            y = y * scale_ref[...]
        y = y + shift_ref[...]
        if apply_act:
            y = jnp.maximum(y, 0.0)          # nn.ReLU
        o_ref[...] = y.astype(o_ref.dtype)


def _tiled_linear(x_p, wt_p, scale_p, shift_p, tm, tn, tk, *, apply_act,
                  has_scale, out_dtype):
    Mp, Kp = x_p.shape
    _, Np = wt_p.shape
    grid = (Mp // tm, Np // tn, Kp // tk)
    return pl.pallas_call(
        functools.partial(_linear_bn_act_kernel, apply_act=apply_act,
                          has_scale=has_scale),
        out_shape=jax.ShapeDtypeStruct((Mp, Np), out_dtype),
        grid_spec=pltpu.PrefetchScalarGridSpec(
            num_scalar_prefetch=0,
            grid=grid,
            in_specs=[
                pl.BlockSpec((tm, tk), lambda i, j, k: (i, k)),   # activations
                pl.BlockSpec((tk, tn), lambda i, j, k: (k, j)),   # W^T (bf16)
                pl.BlockSpec((1, tn), lambda i, j, k: (0, j)),    # scale
                pl.BlockSpec((1, tn), lambda i, j, k: (0, j)),    # shift
            ],
            out_specs=pl.BlockSpec((tm, tn), lambda i, j, k: (i, j)),
            scratch_shapes=[pltpu.VMEM((tm, tn), jnp.float32)],
        ),
        compiler_params=pltpu.CompilerParams(
            dimension_semantics=("parallel", "parallel", "arbitrary"),
            vmem_limit_bytes=_vmem_limit_bytes(),
        ),
    )(x_p, wt_p, scale_p, shift_p)


# ---------------------------------------------------------------------------
# Fused whole-network kernel (small nets): activations never leave VMEM.
# ---------------------------------------------------------------------------
def _fused_mlp_kernel(*refs, meta):
    x_ref, o_ref = refs[0], refs[-1]
    n = len(meta)
    h = x_ref[...]                                   # bf16 activations
    idx = 1
    for li, (apply_act, has_scale) in enumerate(meta):
        w_ref, s_ref, sh_ref = refs[idx], refs[idx + 1], refs[idx + 2]
        idx += 3
        y = jnp.dot(h, w_ref[...], preferred_element_type=jnp.float32)
        if has_scale:
            y = y * s_ref[...]
        y = y + sh_ref[...]
        if apply_act:
            y = jnp.maximum(y, 0.0)
        h = y.astype(jnp.bfloat16) if li + 1 < n else y
    o_ref[...] = h.astype(o_ref.dtype)


def _fused_mlp(x_p, layers):
    inputs = [x_p]
    meta = []
    for L in layers:
        inputs += [L['wt'], L['scale'], L['shift']]
        meta.append((L['act'], L['has_scale']))
    Mp = x_p.shape[0]
    Np = layers[-1]['wt'].shape[1]
    vspec = pl.BlockSpec(memory_space=pltpu.MemorySpace.VMEM)
    # TODO(synk): this single-program kernel uses one TensorCore on v7x; at
    # these tiny sizes launch overhead dominates so fusion still wins.
    return pl.pallas_call(
        functools.partial(_fused_mlp_kernel, meta=tuple(meta)),
        out_shape=jax.ShapeDtypeStruct((Mp, Np), jnp.float32),
        in_specs=[vspec] * len(inputs),
        out_specs=vspec,
        compiler_params=pltpu.CompilerParams(
            vmem_limit_bytes=_vmem_limit_bytes()),
    )(*inputs)


# ---------------------------------------------------------------------------
# Parameter init matching MLP.init_weights(): Linear/BN weights ~ N(0, 0.02),
# biases = 0; BN buffers running_mean=0, running_var=1.
# ---------------------------------------------------------------------------
def init_mlp_params(key, input_size, arch, output_size,
                    batch_norm=True, init_weight=0.02):
    layer_sizes = [input_size] + [int(x) for x in arch.split('-')]
    params = []
    for i in range(len(layer_sizes) - 1):
        key, kw = jax.random.split(key)
        w = init_weight * jax.random.normal(
            kw, (layer_sizes[i + 1], layer_sizes[i]), jnp.float32)
        b = jnp.zeros((layer_sizes[i + 1],), jnp.float32)
        if batch_norm:
            key, kg = jax.random.split(key)
            bn = dict(
                gamma=init_weight * jax.random.normal(
                    kg, (layer_sizes[i + 1],), jnp.float32),
                beta=jnp.zeros((layer_sizes[i + 1],), jnp.float32),
                mean=jnp.zeros((layer_sizes[i + 1],), jnp.float32),
                var=jnp.ones((layer_sizes[i + 1],), jnp.float32),
            )
        else:
            bn = None
        params.append(dict(w=w, b=b, bn=bn, act=True))
    key, kw = jax.random.split(key)
    w = init_weight * jax.random.normal(
        kw, (output_size, layer_sizes[-1]), jnp.float32)
    b = jnp.zeros((output_size,), jnp.float32)
    params.append(dict(w=w, b=b, bn=None, act=False))
    return params


# ---------------------------------------------------------------------------
# One-time inference prep: transpose + pad weights to lane-dense bf16, fold
# bias + eval-mode BN into per-feature f32 (scale, shift), pick tiles.
# ---------------------------------------------------------------------------
def prepare_mlp(params):
    layers = []
    weight_bytes = 0
    prev_np = None
    for li, p in enumerate(params):
        N, K = p['w'].shape
        if li == 0:
            tk, Kp = _tile(K, LANE, TK_CAP)
        else:
            Kp = prev_np                         # chained with previous output
            tk = _largest_div_tile(Kp, LANE, TK_CAP)
        tn, Np = _tile(N, LANE, TN_CAP)
        wt = jnp.pad(p['w'].T.astype(jnp.bfloat16),
                     ((0, Kp - K), (0, Np - N)))
        if p['bn'] is not None:
            s = p['bn']['gamma'] / jnp.sqrt(p['bn']['var'] + EPS)
            scale = s
            shift = (p['b'] - p['bn']['mean']) * s + p['bn']['beta']
            has_scale = True
        else:
            scale = jnp.ones_like(p['b'])        # unused when has_scale=False
            shift = p['b']
            has_scale = False
        scale = jnp.pad(scale, (0, Np - N)).reshape(1, Np).astype(jnp.float32)
        shift = jnp.pad(shift, (0, Np - N)).reshape(1, Np).astype(jnp.float32)
        layers.append(dict(wt=wt, scale=scale, shift=shift,
                           act=bool(p['act']), has_scale=has_scale,
                           Kp=Kp, Np=Np, tk=tk, tn=tn))
        weight_bytes += Kp * Np * 2
        prev_np = Np
    return dict(layers=layers,
                out_features=params[-1]['w'].shape[0],
                fused_ok=weight_bytes <= FUSED_WEIGHT_BYTES)


def mlp_forward(prepped, x, force_tiled=False):
    M, K = x.shape
    layers = prepped['layers']
    Kp0 = layers[0]['Kp']
    fused = prepped['fused_ok'] and (not force_tiled) and M <= FUSED_MAX_BATCH
    if fused:
        Mp = _round_up(M, M_UNIT)
        x_p = jnp.pad(x, ((0, Mp - M), (0, Kp0 - K))).astype(jnp.bfloat16)
        out = _fused_mlp(x_p, layers)
    else:
        tm, Mp = _tile(M, M_UNIT, TM_CAP)
        h = jnp.pad(x, ((0, Mp - M), (0, Kp0 - K))).astype(jnp.bfloat16)
        for li, L in enumerate(layers):
            last = li == len(layers) - 1
            h = _tiled_linear(h, L['wt'], L['scale'], L['shift'],
                              tm, L['tn'], L['tk'],
                              apply_act=L['act'], has_scale=L['has_scale'],
                              out_dtype=jnp.float32 if last else jnp.bfloat16)
        out = h
    return out[:M, :prepped['out_features']]


# ---------------------------------------------------------------------------
# Pure-JAX f32 reference (matches PyTorch eval() forward).
# ---------------------------------------------------------------------------
def mlp_ref(params, x):
    for p in params:
        y = x @ p['w'].T + p['b']
        if p['bn'] is not None:
            bn = p['bn']
            y = (y - bn['mean']) / jnp.sqrt(bn['var'] + EPS) * bn['gamma'] \
                + bn['beta']
        if p['act']:
            y = jnp.maximum(y, 0.0)
        x = y
    return x


if __name__ == "__main__":
    key = jax.random.PRNGKey(0)

    # --- Test 1: tiny network -> single fused whole-network kernel ---------
    B, input_size, arch, output_size = 4, 32, "64-64", 16
    kp, kx, key = jax.random.split(key, 3)
    params = init_mlp_params(kp, input_size, arch, output_size,
                             batch_norm=True, init_weight=0.02)
    prepped = prepare_mlp(params)
    x = jax.random.normal(kx, (B, input_size), jnp.float32)

    out = jax.block_until_ready(jax.jit(lambda v: mlp_forward(prepped, v))(x))
    assert out.shape == (B, output_size)
    ref = mlp_ref(params, x)
    err = float(jnp.max(jnp.abs(out - ref)) /
                (jnp.max(jnp.abs(ref)) + 1e-30))
    assert err < 5e-2, f"fused path rel err {err}"

    # --- Test 2: larger network -> per-layer tiled matmul kernels ----------
    B2, in2, arch2, out_sz2 = 640, 1500, "1200-1200", 700
    kp2, kx2, key = jax.random.split(key, 3)
    params2 = init_mlp_params(kp2, in2, arch2, out_sz2,
                              batch_norm=True, init_weight=0.02)
    prepped2 = prepare_mlp(params2)
    x2 = jax.random.normal(kx2, (B2, in2), jnp.float32)

    out2 = jax.block_until_ready(
        jax.jit(lambda v: mlp_forward(prepped2, v))(x2))
    assert out2.shape == (B2, out_sz2)
    ref2 = mlp_ref(params2, x2)
    err2 = float(jnp.max(jnp.abs(out2 - ref2)) /
                 (jnp.max(jnp.abs(ref2)) + 1e-30))
    assert err2 < 5e-2, f"tiled path rel err {err2}"

    print("KERNEL_OK")
</pallas_src>

<mosaic_0001>
module attributes {stable_mosaic.version = 11 : i64} {
  func.func @_fused_mlp_kernel(%arg0: memref<16x128xbf16, #tpu.memory_space<vmem>>, %arg1: memref<128x128xbf16, #tpu.memory_space<vmem>>, %arg2: memref<1x128xf32, #tpu.memory_space<vmem>>, %arg3: memref<1x128xf32, #tpu.memory_space<vmem>>, %arg4: memref<128x128xbf16, #tpu.memory_space<vmem>>, %arg5: memref<1x128xf32, #tpu.memory_space<vmem>>, %arg6: memref<1x128xf32, #tpu.memory_space<vmem>>, %arg7: memref<128x128xbf16, #tpu.memory_space<vmem>>, %arg8: memref<1x128xf32, #tpu.memory_space<vmem>>, %arg9: memref<1x128xf32, #tpu.memory_space<vmem>>, %arg10: memref<16x128xf32, #tpu.memory_space<vmem>>) attributes {dimension_semantics = [], scalar_prefetch = 0 : i64, scratch_operands = 0 : i64, tpu.core_type = #tpu.core_type<tc>} {
    %c0 = arith.constant 0 : index
    %c0_0 = arith.constant 0 : index
    %0 = vector.load %arg0[%c0, %c0_0] : memref<16x128xbf16, #tpu.memory_space<vmem>>, vector<16x128xbf16>
    %c0_1 = arith.constant 0 : index
    %c0_2 = arith.constant 0 : index
    %1 = vector.load %arg1[%c0_1, %c0_2] : memref<128x128xbf16, #tpu.memory_space<vmem>>, vector<128x128xbf16>
    %cst = arith.constant dense<0.000000e+00> : vector<16x128xf32>
    %2 = tpu.matmul %0, %1, %cst {dimension_numbers = #tpu.dot_dimension_numbers<[1], [0], [0], [1], [0, 0, 1, 1], [], []>} : vector<16x128xbf16>, vector<128x128xbf16>, vector<16x128xf32> -> vector<16x128xf32>
    %c0_3 = arith.constant 0 : index
    %c0_4 = arith.constant 0 : index
    %3 = vector.load %arg2[%c0_3, %c0_4] : memref<1x128xf32, #tpu.memory_space<vmem>>, vector<1x128xf32>
    %4 = vector.broadcast %3 : vector<1x128xf32> to vector<16x128xf32>
    %5 = arith.mulf %2, %4 : vector<16x128xf32>
    %c0_5 = arith.constant 0 : index
    %c0_6 = arith.constant 0 : index
    %6 = vector.load %arg3[%c0_5, %c0_6] : memref<1x128xf32, #tpu.memory_space<vmem>>, vector<1x128xf32>
    %7 = vector.broadcast %6 : vector<1x128xf32> to vector<16x128xf32>
    %8 = arith.addf %5, %7 : vector<16x128xf32>
    %cst_7 = arith.constant 0.000000e+00 : f32
    %9 = vector.broadcast %cst_7 : f32 to vector<16x128xf32>
    %10 = arith.maximumf %8, %9 : vector<16x128xf32>
    %11 = arith.truncf %10 : vector<16x128xf32> to vector<16x128xbf16>
    %c0_8 = arith.constant 0 : index
    %c0_9 = arith.constant 0 : index
    %12 = vector.load %arg4[%c0_8, %c0_9] : memref<128x128xbf16, #tpu.memory_space<vmem>>, vector<128x128xbf16>
    %cst_10 = arith.constant dense<0.000000e+00> : vector<16x128xf32>
    %13 = tpu.matmul %11, %12, %cst_10 {dimension_numbers = #tpu.dot_dimension_numbers<[1], [0], [0], [1], [0, 0, 1, 1], [], []>} : vector<16x128xbf16>, vector<128x128xbf16>, vector<16x128xf32> -> vector<16x128xf32>
    %c0_11 = arith.constant 0 : index
    %c0_12 = arith.constant 0 : index
    %14 = vector.load %arg5[%c0_11, %c0_12] : memref<1x128xf32, #tpu.memory_space<vmem>>, vector<1x128xf32>
    %15 = vector.broadcast %14 : vector<1x128xf32> to vector<16x128xf32>
    %16 = arith.mulf %13, %15 : vector<16x128xf32>
    %c0_13 = arith.constant 0 : index
    %c0_14 = arith.constant 0 : index
    %17 = vector.load %arg6[%c0_13, %c0_14] : memref<1x128xf32, #tpu.memory_space<vmem>>, vector<1x128xf32>
    %18 = vector.broadcast %17 : vector<1x128xf32> to vector<16x128xf32>
    %19 = arith.addf %16, %18 : vector<16x128xf32>
    %cst_15 = arith.constant 0.000000e+00 : f32
    %20 = vector.broadcast %cst_15 : f32 to vector<16x128xf32>
    %21 = arith.maximumf %19, %20 : vector<16x128xf32>
    %22 = arith.truncf %21 : vector<16x128xf32> to vector<16x128xbf16>
    %c0_16 = arith.constant 0 : index
    %c0_17 = arith.constant 0 : index
    %23 = vector.load %arg7[%c0_16, %c0_17] : memref<128x128xbf16, #tpu.memory_space<vmem>>, vector<128x128xbf16>
    %cst_18 = arith.constant dense<0.000000e+00> : vector<16x128xf32>
    %24 = tpu.matmul %22, %23, %cst_18 {dimension_numbers = #tpu.dot_dimension_numbers<[1], [0], [0], [1], [0, 0, 1, 1], [], []>} : vector<16x128xbf16>, vector<128x128xbf16>, vector<16x128xf32> -> vector<16x128xf32>
    %c0_19 = arith.constant 0 : index
    %c0_20 = arith.constant 0 : index
    %25 = vector.load %arg9[%c0_19, %c0_20] : memref<1x128xf32, #tpu.memory_space<vmem>>, vector<1x128xf32>
    %26 = vector.broadcast %25 : vector<1x128xf32> to vector<16x128xf32>
    %27 = arith.addf %24, %26 : vector<16x128xf32>
    %c0_21 = arith.constant 0 : index
    %c0_22 = arith.constant 0 : index
    %28 = vector.load %arg10[%c0_21, %c0_22] : memref<16x128xf32, #tpu.memory_space<vmem>>, vector<16x128xf32>
    tpu.vector_store %arg10[%c0_21, %c0_22], %27 {strides = array<i32>} : memref<16x128xf32, #tpu.memory_space<vmem>>, vector<16x128xf32>,
    return
  }
}

</mosaic_0001>

<llo_original>
// kernel: _lambda_.1
$region0: #{_lambda_.1}
  #allocation0 [shape = 'u32[]', space=smem, size = 0x4, offset = 0x4, fixed_abs, tag = 'smem constant byte address 0x4 - core index']
  #allocation1 [shape = 'u32[72,128]{1,0:T(1,128)}', space=vmem, size = 0x9000, scoped, tag = 'internal scratch']
  %s0 = inlined_call_operand.vmem [shape: bf16[16,128], index: 0, kind: input, shape index: {}]
  %s1 = inlined_call_operand.hbm [shape: bf16[128,128], index: 1, kind: input, shape index: {}]
  %s2 = inlined_call_operand.vmem [shape: f32[1,128], index: 2, kind: input, shape index: {}]
  %s3 = inlined_call_operand.vmem [shape: f32[1,128], index: 3, kind: input, shape index: {}, may-alias: {3,6,9}]
  %s4 = inlined_call_operand.hbm [shape: bf16[128,128], index: 4, kind: input, shape index: {}]
  %s5 = inlined_call_operand.vmem [shape: f32[1,128], index: 5, kind: input, shape index: {}]
  %s6 = inlined_call_operand.vmem [shape: f32[1,128], index: 6, kind: input, shape index: {}, may-alias: {3,6,9}]
  %s7 = inlined_call_operand.hbm [shape: bf16[128,128], index: 7, kind: input, shape index: {}]
  %s8 = inlined_call_operand.vmem [shape: f32[1,128], index: 8, kind: input, shape index: {}]
  %s9 = inlined_call_operand.vmem [shape: f32[1,128], index: 9, kind: input, shape index: {}, may-alias: {3,6,9}]
  %s10 = inlined_call_operand.vmem [shape: f32[16,128], index: 10, kind: output, shape index: {}]
  %s11 = sld [smem:[#allocation0]]
  $region62: #{_lambda_.1} parent=0
    _
  %s13 = ssub.s32 1, %s11
  %s14 = scalar_select 0, %s13, %s11
  $region1: #{_lambda_.1} parent=0
    #allocation2 [shape = 'u8[32768]{0}', space=vmem, size = 0x8000, scoped, tag = 'input window, operand 1, single buffered']
    #allocation3 [shape = 's32[1]{0}', space=sflag, size = 0x4, scoped, tag = 'scoped memory for _lambda_.1']
    #allocation4 [shape = 'u8[32768]{0}', space=vmem, size = 0x8000, scoped, tag = 'input window, operand 4, single buffered']
    #allocation5 [shape = 's32[1]{0}', space=sflag, size = 0x4, scoped, tag = 'scoped memory for _lambda_.1']
    #allocation6 [shape = 'u8[32768]{0}', space=vmem, size = 0x8000, scoped, tag = 'input window, operand 7, single buffered']
    %15 = vsyncpa [#allocation3], 0
    %16 = vsyncpa [#allocation5], 0
    // Predicated region
    $region2: #{_lambda_.1} parent=1 // pred_check
      _
    $region3: #{_lambda_.1} parent=1 // pred_check_branch
      %18 = sbr.rel (0) target = $region5
    $region4: #{_lambda_.1} parent=1 // pred_region
      _
    $region5: #{_lambda_.1} parent=1 // pred_fallthru
      _
    // Predicated region
    $region6: #{_lambda_.1} parent=1 // pred_check
      _
    $region7: #{_lambda_.1} parent=1 // pred_check_branch
      %20 = sbr.rel (0) target = $region9
    $region8: #{_lambda_.1} parent=1 // pred_region
      %22 = vsyncadd [#allocation3], 0
      %s23 = sshll.u32 %s1, 4
      %s24 = int_to_ptr.hbm [resolvable:$true] %s23
      %s25 = sshll.u32 [#allocation2], 4
      %s26 = int_to_ptr.vmem [resolvable:$true] %s25
      %31 = dma.hbm_to_vmem [thread:$0]  %s24, 1024, %s26, [#allocation3], 64, 64, 4
    $region9: #{_lambda_.1} parent=1 // pred_fallthru
      _
    // Predicated region
    $region10: #{_lambda_.1} parent=1 // pred_check
      _
    $region11: #{_lambda_.1} parent=1 // pred_check_branch
      %33 = sbr.rel (0) target = $region13
    $region12: #{_lambda_.1} parent=1 // pred_region
      _
    $region13: #{_lambda_.1} parent=1 // pred_fallthru
      _
    // Predicated region
    $region14: #{_lambda_.1} parent=1 // pred_check
      _
    $region15: #{_lambda_.1} parent=1 // pred_check_branch
      %35 = sbr.rel (0) target = $region17
    $region16: #{_lambda_.1} parent=1 // pred_region
      _
    $region17: #{_lambda_.1} parent=1 // pred_fallthru
      _
    // Predicated region
    $region18: #{_lambda_.1} parent=1 // pred_check
      _
    $region19: #{_lambda_.1} parent=1 // pred_check_branch
      %37 = sbr.rel (0) target = $region21
    $region20: #{_lambda_.1} parent=1 // pred_region
      %39 = vsyncadd [#allocation5], 0
      %s40 = sshll.u32 %s4, 4
      %s41 = int_to_ptr.hbm [resolvable:$true] %s40
      %s42 = sshll.u32 [#allocation4], 4
      %s43 = int_to_ptr.vmem [resolvable:$true] %s42
      %48 = dma.hbm_to_vmem [thread:$0]  %s41, 1024, %s43, [#allocation5], 64, 64, 4
    $region21: #{_lambda_.1} parent=1 // pred_fallthru
      _
    // Predicated region
    $region22: #{_lambda_.1} parent=1 // pred_check
      _
    $region23: #{_lambda_.1} parent=1 // pred_check_branch
      %50 = sbr.rel (0) target = $region25
    $region24: #{_lambda_.1} parent=1 // pred_region
      _
    $region25: #{_lambda_.1} parent=1 // pred_fallthru
      _
    // Predicated region
    $region26: #{_lambda_.1} parent=1 // pred_check
      _
    $region27: #{_lambda_.1} parent=1 // pred_check_branch
      %52 = sbr.rel (0) target = $region29
    $region28: #{_lambda_.1} parent=1 // pred_region
      _
    $region29: #{_lambda_.1} parent=1 // pred_fallthru
      _
    // Predicated region
    $region30: #{_lambda_.1} parent=1 // pred_check
      _
    $region31: #{_lambda_.1} parent=1 // pred_check_branch
      %54 = sbr.rel (0) target = $region33
    $region32: #{_lambda_.1} parent=1 // pred_region
      %56 = vsyncadd [#allocation5], 0
      %s57 = sshll.u32 %s7, 4
      %s58 = int_to_ptr.hbm [resolvable:$true] %s57
      %s59 = sshll.u32 [#allocation6], 4
      %s60 = int_to_ptr.vmem [resolvable:$true] %s59
      %65 = dma.hbm_to_vmem [thread:$0]  %s58, 1024, %s60, [#allocation5], 64, 64, 4
    $region33: #{_lambda_.1} parent=1 // pred_fallthru
      _
    // Predicated region
    $region34: #{_lambda_.1} parent=1 // pred_check
      _
    $region35: #{_lambda_.1} parent=1 // pred_check_branch
      %67 = sbr.rel (0) target = $region37
    $region36: #{_lambda_.1} parent=1 // pred_region
      _
    $region37: #{_lambda_.1} parent=1 // pred_fallthru
      _
    // Predicated region
    $region38: #{_lambda_.1} parent=1 // pred_check
      _
    $region39: #{_lambda_.1} parent=1 // pred_check_branch
      %69 = sbr.rel (0) target = $region41
    $region40: #{_lambda_.1} parent=1 // pred_region
      _
    $region41: #{_lambda_.1} parent=1 // pred_fallthru
      _
    // Predicated region
    $region42: #{_lambda_.1} parent=1 // pred_check
      _
    $region43: #{_lambda_.1} parent=1 // pred_check_branch
      %71 = sbr.rel (0) target = $region45
    $region44: #{_lambda_.1} parent=1 // pred_region
      %73 = dma.done [#allocation3], 1024
    $region45: #{_lambda_.1} parent=1 // pred_fallthru
      _
    // Predicated region
    $region46: #{_lambda_.1} parent=1 // pred_check
      _
    $region47: #{_lambda_.1} parent=1 // pred_check_branch
      %75 = sbr.rel (0) target = $region49
    $region48: #{_lambda_.1} parent=1 // pred_region
      %77 = dma.done [#allocation5], 1024
    $region49: #{_lambda_.1} parent=1 // pred_fallthru
      _
    // Predicated region
    $region50: #{_lambda_.1} parent=1 // pred_check
      _
    $region51: #{_lambda_.1} parent=1 // pred_check_branch
      %79 = sbr.rel (0) target = $region53
    $region52: #{_lambda_.1} parent=1 // pred_region
      %81 = dma.done [#allocation5], 1024
    $region53: #{_lambda_.1} parent=1 // pred_fallthru
      _
    %v82 = vld [vmem:[%s0] sm:$0xf]
    %v83 = vld [vmem:[%s0 + $0x4] sm:$0xf]
    %v84 = vld [vmem:[#allocation2] sm:$0xf]
    %v85 = vld [vmem:[#allocation2 + $0x4] sm:$0xf]
    %v86 = vld [vmem:[#allocation2 + $0x8] sm:$0xf]
    %v87 = vld [vmem:[#allocation2 + $0xc] sm:$0xf]
    %v88 = vld [vmem:[#allocation2 + $0x10] sm:$0xf]
    %v89 = vld [vmem:[#allocation2 + $0x14] sm:$0xf]
    %v90 = vld [vmem:[#allocation2 + $0x18] sm:$0xf]
    %v91 = vld [vmem:[#allocation2 + $0x1c] sm:$0xf]
    %v92 = vld [vmem:[#allocation2 + $0x20] sm:$0xf]
    %v93 = vld [vmem:[#allocation2 + $0x24] sm:$0xf]
    %v94 = vld [vmem:[#allocation2 + $0x28] sm:$0xf]
    %v95 = vld [vmem:[#allocation2 + $0x2c] sm:$0xf]
    %v96 = vld [vmem:[#allocation2 + $0x30] sm:$0xf]
    %v97 = vld [vmem:[#allocation2 + $0x34] sm:$0xf]
    %v98 = vld [vmem:[#allocation2 + $0x38] sm:$0xf]
    %v99 = vld [vmem:[#allocation2 + $0x3c] sm:$0xf]
    %v102 = vunpack.c.l.b16 %v82
    %v103 = vunpack.c.l.b16 %v83
    %v104 = vpack.c.b16 %v103, %v102
    %v122 = vunpack.c.l.b16 %v84
    %v123 = vunpack.c.l.b16 %v85
    %v124 = vunpack.c.l.b16 %v86
    %v125 = vunpack.c.l.b16 %v87
    %v126 = vunpack.c.l.b16 %v88
    %v127 = vunpack.c.l.b16 %v89
    %v128 = vunpack.c.l.b16 %v90
    %v129 = vunpack.c.l.b16 %v91
    %v130 = vunpack.c.l.b16 %v92
    %v131 = vunpack.c.l.b16 %v93
    %v132 = vunpack.c.l.b16 %v94
    %v133 = vunpack.c.l.b16 %v95
    %v134 = vunpack.c.l.b16 %v96
    %v135 = vunpack.c.l.b16 %v97
    %v136 = vunpack.c.l.b16 %v98
    %v137 = vunpack.c.l.b16 %v99
    %v138 = vpack.c.b16 %v123, %v122
    %v139 = vpack.c.b16 %v125, %v124
    %v140 = vpack.c.b16 %v127, %v126
    %v141 = vpack.c.b16 %v129, %v128
    %v142 = vpack.c.b16 %v131, %v130
    %v143 = vpack.c.b16 %v133, %v132
    %v144 = vpack.c.b16 %v135, %v134
    %v145 = vpack.c.b16 %v137, %v136
    %154 = vmatpush.bf16.msra.mxu0 %v145
    %155 = vmatpush.bf16.msra.mxu0 %v144
    %156 = vmatpush.bf16.msra.mxu0 %v143
    %157 = vmatpush.bf16.msra.mxu0 %v142
    %158 = vmatpush.bf16.msra.mxu0 %v141
    %159 = vmatpush.bf16.msra.mxu0 %v140
    %160 = vmatpush.bf16.msra.mxu0 %v139
    %161 = vmatpush.bf16.msra.mxu0 %v138
    %162 = vmatmul.bf16.gmra.mxu0 %v104
    %v163 = vpop.f32.mrf.mxu0
    %v164 = vadd.f32 0.0, %v163
    %v165 = vpop.f32.mrf.mxu0
    %v166 = vadd.f32 0.0, %v165
    %167 = vdwg.mxu0
    %v168 = vld [vmem:[%s2] sm:$0x1]
    %v170 = vperm.slane %v168, 0
    %v172 = vmul.f32 %v164, %v170
    %v173 = vmul.f32 %v166, %v170
    %v174 = vld [vmem:[%s3] sm:$0x1]
    %v176 = vperm.slane %v174, 0
    %v178 = vadd.f32 %v172, %v176
    %v179 = vadd.f32 %v173, %v176
    %v180 = vmax.f32 %v178, 0.0
    %v181 = vmax.f32 %v179, 0.0
    %v182 = vpack.c.bf16 %v181, %v180
    %v183 = vld [vmem:[#allocation4] sm:$0xf]
    %v184 = vld [vmem:[#allocation4 + $0x4] sm:$0xf]
    %v185 = vld [vmem:[#allocation4 + $0x8] sm:$0xf]
    %v186 = vld [vmem:[#allocation4 + $0xc] sm:$0xf]
    %v187 = vld [vmem:[#allocation4 + $0x10] sm:$0xf]
    %v188 = vld [vmem:[#allocation4 + $0x14] sm:$0xf]
    %v189 = vld [vmem:[#allocation4 + $0x18] sm:$0xf]
    %v190 = vld [vmem:[#allocation4 + $0x1c] sm:$0xf]
    %v191 = vld [vmem:[#allocation4 + $0x20] sm:$0xf]
    %v192 = vld [vmem:[#allocation4 + $0x24] sm:$0xf]
    %v193 = vld [vmem:[#allocation4 + $0x28] sm:$0xf]
    %v194 = vld [vmem:[#allocation4 + $0x2c] sm:$0xf]
    %v195 = vld [vmem:[#allocation4 + $0x30] sm:$0xf]
    %v196 = vld [vmem:[#allocation4 + $0x34] sm:$0xf]
    %v197 = vld [vmem:[#allocation4 + $0x38] sm:$0xf]
    %v198 = vld [vmem:[#allocation4 + $0x3c] sm:$0xf]
    %v215 = vunpack.c.l.b16 %v183
    %v216 = vunpack.c.l.b16 %v184
    %v217 = vunpack.c.l.b16 %v185
    %v218 = vunpack.c.l.b16 %v186
    %v219 = vunpack.c.l.b16 %v187
    %v220 = vunpack.c.l.b16 %v188
    %v221 = vunpack.c.l.b16 %v189
    %v222 = vunpack.c.l.b16 %v190
    %v223 = vunpack.c.l.b16 %v191
    %v224 = vunpack.c.l.b16 %v192
    %v225 = vunpack.c.l.b16 %v193
    %v226 = vunpack.c.l.b16 %v194
    %v227 = vunpack.c.l.b16 %v195
    %v228 = vunpack.c.l.b16 %v196
    %v229 = vunpack.c.l.b16 %v197
    %v230 = vunpack.c.l.b16 %v198
    %v231 = vpack.c.b16 %v216, %v215
    %v232 = vpack.c.b16 %v218, %v217
    %v233 = vpack.c.b16 %v220, %v219
    %v234 = vpack.c.b16 %v222, %v221
    %v235 = vpack.c.b16 %v224, %v223
    %v236 = vpack.c.b16 %v226, %v225
    %v237 = vpack.c.b16 %v228, %v227
    %v238 = vpack.c.b16 %v230, %v229
    %247 = vmatpush.bf16.msra.mxu0 %v238
    %248 = vmatpush.bf16.msra.mxu0 %v237
    %249 = vmatpush.bf16.msra.mxu0 %v236
    %250 = vmatpush.bf16.msra.mxu0 %v235
    %251 = vmatpush.bf16.msra.mxu0 %v234
    %252 = vmatpush.bf16.msra.mxu0 %v233
    %253 = vmatpush.bf16.msra.mxu0 %v232
    %254 = vmatpush.bf16.msra.mxu0 %v231
    %255 = vmatmul.bf16.gmra.mxu0 %v182
    %v256 = vpop.f32.mrf.mxu0
    %v257 = vadd.f32 0.0, %v256
    %v258 = vpop.f32.mrf.mxu0
    %v259 = vadd.f32 0.0, %v258
    %260 = vdwg.mxu0
    %v261 = vld [vmem:[%s5] sm:$0x1]
    %v263 = vperm.slane %v261, 0
    %v265 = vmul.f32 %v257, %v263
    %v266 = vmul.f32 %v259, %v263
    %v267 = vld [vmem:[%s6] sm:$0x1]
    %v269 = vperm.slane %v267, 0
    %v271 = vadd.f32 %v265, %v269
    %v272 = vadd.f32 %v266, %v269
    %v273 = vmax.f32 %v271, 0.0
    %v274 = vmax.f32 %v272, 0.0
    %v275 = vpack.c.bf16 %v274, %v273
    %v276 = vld [vmem:[#allocation6] sm:$0xf]
    %v277 = vld [vmem:[#allocation6 + $0x4] sm:$0xf]
    %v278 = vld [vmem:[#allocation6 + $0x8] sm:$0xf]
    %v279 = vld [vmem:[#allocation6 + $0xc] sm:$0xf]
    %v280 = vld [vmem:[#allocation6 + $0x10] sm:$0xf]
    %v281 = vld [vmem:[#allocation6 + $0x14] sm:$0xf]
    %v282 = vld [vmem:[#allocation6 + $0x18] sm:$0xf]
    %v283 = vld [vmem:[#allocation6 + $0x1c] sm:$0xf]
    %v284 = vld [vmem:[#allocation6 + $0x20] sm:$0xf]
    %v285 = vld [vmem:[#allocation6 + $0x24] sm:$0xf]
    %v286 = vld [vmem:[#allocation6 + $0x28] sm:$0xf]
    %v287 = vld [vmem:[#allocation6 + $0x2c] sm:$0xf]
    %v288 = vld [vmem:[#allocation6 + $0x30] sm:$0xf]
    %v289 = vld [vmem:[#allocation6 + $0x34] sm:$0xf]
    %v290 = vld [vmem:[#allocation6 + $0x38] sm:$0xf]
    %v291 = vld [vmem:[#allocation6 + $0x3c] sm:$0xf]
    %v292 = vld [vmem:[%s9] sm:$0x1]
    %v294 = vperm.slane %v292, 0
    %v312 = vunpack.c.l.b16 %v276
    %v313 = vunpack.c.l.b16 %v277
    %v314 = vunpack.c.l.b16 %v278
    %v315 = vunpack.c.l.b16 %v279
    %v316 = vunpack.c.l.b16 %v280
    %v317 = vunpack.c.l.b16 %v281
    %v318 = vunpack.c.l.b16 %v282
    %v319 = vunpack.c.l.b16 %v283
    %v320 = vunpack.c.l.b16 %v284
    %v321 = vunpack.c.l.b16 %v285
    %v322 = vunpack.c.l.b16 %v286
    %v323 = vunpack.c.l.b16 %v287
    %v324 = vunpack.c.l.b16 %v288
    %v325 = vunpack.c.l.b16 %v289
    %v326 = vunpack.c.l.b16 %v290
    %v327 = vunpack.c.l.b16 %v291
    %v328 = vpack.c.b16 %v313, %v312
    %v329 = vpack.c.b16 %v315, %v314
    %v330 = vpack.c.b16 %v317, %v316
    %v331 = vpack.c.b16 %v319, %v318
    %v332 = vpack.c.b16 %v321, %v320
    %v333 = vpack.c.b16 %v323, %v322
    %v334 = vpack.c.b16 %v325, %v324
    %v335 = vpack.c.b16 %v327, %v326
    %344 = vmatpush.bf16.msra.mxu0 %v335
    %345 = vmatpush.bf16.msra.mxu0 %v334
    %346 = vmatpush.bf16.msra.mxu0 %v333
    %347 = vmatpush.bf16.msra.mxu0 %v332
    %348 = vmatpush.bf16.msra.mxu0 %v331
    %349 = vmatpush.bf16.msra.mxu0 %v330
    %350 = vmatpush.bf16.msra.mxu0 %v329
    %351 = vmatpush.bf16.msra.mxu0 %v328
    %352 = vmatmul.bf16.gmra.mxu0 %v275
    %v353 = vpop.f32.mrf.mxu0
    %v354 = vadd.f32 %v294, %v353
    %v355 = vpop.f32.mrf.mxu0
    %v356 = vadd.f32 %v294, %v355
    %357 = vdwg.mxu0
    %358 = vst [vmem:[%s10] sm:$0xff] %v354
    %359 = vst [vmem:[%s10 + $0x8] sm:$0xff] %v356
    // Predicated region
    $region54: #{_lambda_.1} parent=1 // pred_check
      _
    $region55: #{_lambda_.1} parent=1 // pred_check_branch
      %361 = sbr.rel (0) target = $region57
    $region56: #{_lambda_.1} parent=1 // pred_region
      _
    $region57: #{_lambda_.1} parent=1 // pred_fallthru
      _
    // Predicated region
    $region58: #{_lambda_.1} parent=1 // pred_check
      _
    $region59: #{_lambda_.1} parent=1 // pred_check_branch
      %363 = sbr.rel (0) target = $region61
    $region60: #{_lambda_.1} parent=1 // pred_region
      _
    $region61: #{_lambda_.1} parent=1 // pred_fallthru
      _
    %364 = vsyncpa [#allocation3], 1
    %365 = vsyncpa [#allocation5], 1

</llo_original>
